<compile_context>
chip_gen: v6e
topology: v6e:2x2x1
jax: 0.10.0
libtpu: 0.0.40
codegen_flags: <defaults>
</compile_context>

<pallas_src>
import functools

import jax
import jax.numpy as jnp
from jax import lax
from jax.experimental import pallas as pl
from jax.experimental.pallas import tpu as pltpu


def _tv_kernel(mv_ref, mh_ref, x_ref, out_ref, *, w, tb, bc, ragged):
    """One grid step: partial TV sums over a (TB, H*W) block of planes.

    mv_ref : (1, L) f32 vertical-pair validity mask   (lane j < L - W)
    mh_ref : (1, L) f32 horizontal-pair validity mask (lane j % W != W - 1)
    x_ref  : (TB, L) input tile, L = H*W (each sublane-row is one full plane)
    out_ref: (1, 1, 128) f32; lane 0 = sum((dx_h)^2), lane 1 = sum((dx_w)^2)
    """
    x = x_ref[...]
    _, L = x.shape

    if ragged:
        # Last block may read past B*C (garbage rows); zero them.  Zero planes
        # contribute zero TV.  Only emitted when no divisor-friendly tb exists.
        valid = bc - pl.program_id(0) * tb
        row = lax.broadcasted_iota(jnp.int32, (x.shape[0], 1), 0)
        x = jnp.where(row < valid, x, jnp.zeros_like(x))

    mv = mv_ref[...]          # (1, L) f32, VMEM-resident across grid steps
    mh = mh_ref[...]          # (1, L) f32

    # Vertical neighbour (next image row): lane offset +W via an XLU roll.
    xv = pltpu.roll(x, shift=(L - w) % L, axis=1)      # xv[j] = x[(j + w) % L]
    dv = (xv - x).astype(jnp.float32) * mv
    # Horizontal neighbour (next column): lane offset +1.
    xh = pltpu.roll(x, shift=(L - 1) % L, axis=1)      # xh[j] = x[(j + 1) % L]
    dh = (xh - x).astype(jnp.float32) * mh

    h_sum = jnp.sum(dv * dv)
    w_sum = jnp.sum(dh * dh)

    # Lane-dense partial-sum block (single unmasked store).
    lane = lax.broadcasted_iota(jnp.int32, out_ref.shape, 2)
    out_ref[...] = jnp.where(lane == 0, h_sum,
                             jnp.where(lane == 1, w_sum, jnp.float32(0.0)))


def _vmem_capacity_bytes() -> int:
    try:
        return int(pltpu.get_tpu_info().vmem_capacity_bytes)
    except Exception:
        return 128 << 20    # v5e / v6e default


def _pick_tb(bc, plane_bytes, target_bytes, pack):
    """Pick planes-per-block.  Returns (tb, needs_row_mask)."""
    cap = target_bytes // max(plane_bytes, 1)
    if cap >= bc:
        return bc, False                    # everything fits in one block
    if cap < 8:
        # Planes are huge relative to the block budget: one plane per step.
        # TODO(synk): tile H with a 1-row halo instead of whole-plane blocks
        # (needed for very large images, especially on v7x's 64 MiB VMEM).
        return 1, False
    # Prefer a sublane-aligned divisor of bc: no padding, no in-kernel masking.
    best = 0
    for d in range(int(cap), 7, -1):
        if bc % d == 0 and d % 8 == 0:
            best = d
            break
    if best >= max(8, cap // 4):
        return best, False
    # Ragged fallback: dtype-packed tb, mask the tail rows of the last block.
    tb = (cap // pack) * pack
    if tb == 0:
        tb = (cap // 8) * 8
    return max(8, tb), True


def l_tv(x, tv_loss_weight: float = 1.0, *, target_block_bytes: int | None = None):
    """Total-variation loss matching the PyTorch L_TV.forward semantics."""
    b, c, h, w = x.shape
    bc, L = b * c, h * w
    x2 = x.reshape(bc, L)        # free for contiguous (B, C, H, W) layouts

    itemsize = jnp.dtype(x.dtype).itemsize
    pack = max(8, 32 // itemsize)            # 8 f32 / 16 bf16 / 32 int8 rows
    plane_bytes = L * itemsize

    vmem_cap = _vmem_capacity_bytes()
    if target_block_bytes is None:
        # Smaller streaming blocks on 64 MiB-VMEM parts (v7x), larger elsewhere.
        target_block_bytes = (8 << 20) if vmem_cap <= (64 << 20) else (12 << 20)

    tb, ragged = _pick_tb(bc, plane_bytes, target_block_bytes, pack)
    nb = pl.cdiv(bc, tb)

    # Hoisted pair-validity masks (built once; VMEM-resident across steps).
    j = jnp.arange(L, dtype=jnp.int32)
    mv = (j < (L - w)).astype(jnp.float32).reshape(1, L)
    mh = ((j % w) != (w - 1)).astype(jnp.float32).reshape(1, L)

    block_bytes = tb * plane_bytes
    f32_block = tb * L * 4
    needed = 2 * block_bytes + 3 * f32_block + (4 << 20)
    vmem_limit = int(min(max(needed, 32 << 20), int(0.75 * vmem_cap)))

    kernel = functools.partial(_tv_kernel, w=w, tb=tb, bc=bc, ragged=ragged)

    partials = pl.pallas_call(
        kernel,
        out_shape=jax.ShapeDtypeStruct((nb, 1, 128), jnp.float32),
        grid_spec=pltpu.PrefetchScalarGridSpec(
            num_scalar_prefetch=0,
            grid=(nb,),
            in_specs=[
                pl.BlockSpec((1, L), lambda i: (0, 0)),    # vertical mask
                pl.BlockSpec((1, L), lambda i: (0, 0)),    # horizontal mask
                pl.BlockSpec((tb, L), lambda i: (i, 0)),   # streamed planes
            ],
            out_specs=pl.BlockSpec((1, 1, 128), lambda i: (i, 0, 0)),
        ),
        compiler_params=pltpu.CompilerParams(
            dimension_semantics=("parallel",),
            vmem_limit_bytes=vmem_limit,
        ),
        cost_estimate=pl.CostEstimate(
            flops=8 * bc * L,
            transcendentals=0,
            bytes_accessed=bc * L * itemsize + 2 * L * 4 + nb * 128 * 4,
        ),
    )(mv, mh, x2)

    h_sum = jnp.sum(partials[:, 0, 0])
    w_sum = jnp.sum(partials[:, 0, 1])
    # Matches PyTorch exactly, including division-by-zero when H == 1 or W == 1.
    count_h = (h - 1) * w
    count_w = h * (w - 1)
    return tv_loss_weight * 2.0 * (h_sum / count_h + w_sum / count_w) / b


def _reference(x, tv_loss_weight: float = 1.0):
    b, _, h, w = x.shape
    count_h = (h - 1) * w
    count_w = h * (w - 1)
    h_tv = jnp.sum((x[:, :, 1:, :] - x[:, :, :-1, :]) ** 2)
    w_tv = jnp.sum((x[:, :, :, 1:] - x[:, :, :, :-1]) ** 2)
    return tv_loss_weight * 2.0 * (h_tv / count_h + w_tv / count_w) / b


if __name__ == "__main__":
    key = jax.random.PRNGKey(0)
    x = jax.random.normal(key, (2, 4, 16, 16), dtype=jnp.float32)

    out = jax.block_until_ready(l_tv(x))
    ref = jax.block_until_ready(_reference(x))

    assert jnp.allclose(out, ref, rtol=1e-5, atol=1e-5), (out, ref)
    print("KERNEL_OK")
</pallas_src>

<mosaic_0001>
module attributes {stable_mosaic.version = 11 : i64} {
  func.func @_tv_kernel(%arg0: i32, %arg1: memref<1x256xf32, #tpu.memory_space<vmem>>, %arg2: memref<1x256xf32, #tpu.memory_space<vmem>>, %arg3: memref<8x256xf32, #tpu.memory_space<vmem>>, %arg4: memref<1x1x128xf32, #tpu.memory_space<vmem>>) attributes {dimension_semantics = [#tpu.dimension_semantics<parallel>], iteration_bounds = array<i64: 1>, scalar_prefetch = 0 : i64, scratch_operands = 0 : i64, tpu.core_type = #tpu.core_type<tc>, window_params = [{pipeline_mode = #tpu.pipeline_mode<synchronous>, transform_indices = @transform_0, window_bounds = array<i64: 1, 256>}, {pipeline_mode = #tpu.pipeline_mode<synchronous>, transform_indices = @transform_1, window_bounds = array<i64: 1, 256>}, {transform_indices = @transform_2, window_bounds = array<i64: 8, 256>}, {transform_indices = @transform_3, window_bounds = array<i64: 1, 1, 128>}]} {
    %c0 = arith.constant 0 : index
    %c0_0 = arith.constant 0 : index
    %0 = vector.load %arg3[%c0, %c0_0] : memref<8x256xf32, #tpu.memory_space<vmem>>, vector<8x256xf32>
    %c0_1 = arith.constant 0 : index
    %c0_2 = arith.constant 0 : index
    %1 = vector.load %arg1[%c0_1, %c0_2] : memref<1x256xf32, #tpu.memory_space<vmem>>, vector<1x256xf32>
    %c0_3 = arith.constant 0 : index
    %c0_4 = arith.constant 0 : index
    %2 = vector.load %arg2[%c0_3, %c0_4] : memref<1x256xf32, #tpu.memory_space<vmem>>, vector<1x256xf32>
    %c240_i32 = arith.constant 240 : i32
    %3 = tpu.dynamic_rotate %0 by %c240_i32 dim 1 : vector<8x256xf32>, i32 -> vector<8x256xf32>
    %4 = arith.subf %3, %0 : vector<8x256xf32>
    %5 = vector.broadcast %1 : vector<1x256xf32> to vector<8x256xf32>
    %6 = arith.mulf %4, %5 : vector<8x256xf32>
    %c255_i32 = arith.constant 255 : i32
    %7 = tpu.dynamic_rotate %0 by %c255_i32 dim 1 : vector<8x256xf32>, i32 -> vector<8x256xf32>
    %8 = arith.subf %7, %0 : vector<8x256xf32>
    %9 = vector.broadcast %2 : vector<1x256xf32> to vector<8x256xf32>
    %10 = arith.mulf %8, %9 : vector<8x256xf32>
    %11 = arith.mulf %6, %6 : vector<8x256xf32>
    %12 = vector.shape_cast %11 : vector<8x256xf32> to vector<1x8x256xf32>
    %cst = arith.constant dense<0.000000e+00> : vector<1xf32>
    %13 = vector.multi_reduction <add>, %12, %cst [1, 2] : vector<1x8x256xf32> to vector<1xf32>
    %14 = vector.shape_cast %13 : vector<1xf32> to vector<1x1x1xf32>
    %15 = vector.extract %14[0, 0, 0] : f32 from vector<1x1x1xf32>
    %16 = arith.mulf %10, %10 : vector<8x256xf32>
    %17 = vector.shape_cast %16 : vector<8x256xf32> to vector<1x8x256xf32>
    %cst_5 = arith.constant dense<0.000000e+00> : vector<1xf32>
    %18 = vector.multi_reduction <add>, %17, %cst_5 [1, 2] : vector<1x8x256xf32> to vector<1xf32>
    %19 = vector.shape_cast %18 : vector<1xf32> to vector<1x1x1xf32>
    %20 = vector.extract %19[0, 0, 0] : f32 from vector<1x1x1xf32>
    %21 = tpu.iota {dimensions = array<i32: 2>} : vector<1x1x128xi32>
    %c0_i32 = arith.constant 0 : i32
    %22 = vector.broadcast %c0_i32 : i32 to vector<1x1x128xi32>
    %23 = arith.cmpi eq, %21, %22 : vector<1x1x128xi32>
    %c1_i32 = arith.constant 1 : i32
    %24 = vector.broadcast %c1_i32 : i32 to vector<1x1x128xi32>
    %25 = arith.cmpi eq, %21, %24 : vector<1x1x128xi32>
    %cst_6 = arith.constant 0.000000e+00 : f32
    %26 = vector.broadcast %20 : f32 to vector<1x1x128xf32>
    %27 = vector.broadcast %cst_6 : f32 to vector<1x1x128xf32>
    %28 = arith.select %25, %26, %27 : vector<1x1x128xi1>, vector<1x1x128xf32>
    %29 = vector.broadcast %15 : f32 to vector<1x1x128xf32>
    %30 = arith.select %23, %29, %28 : vector<1x1x128xi1>, vector<1x1x128xf32>
    %c0_7 = arith.constant 0 : index
    %c0_8 = arith.constant 0 : index
    %c0_9 = arith.constant 0 : index
    %31 = vector.load %arg4[%c0_7, %c0_8, %c0_9] : memref<1x1x128xf32, #tpu.memory_space<vmem>>, vector<1x1x128xf32>
    tpu.vector_store %arg4[%c0_7, %c0_8, %c0_9], %30 {strides = array<i32>} : memref<1x1x128xf32, #tpu.memory_space<vmem>>, vector<1x1x128xf32>,
    return
  }
  func.func @transform_0(%arg0: i32) -> (i32, i32) {
    %c0_i32 = arith.constant 0 : i32
    %c0_i32_0 = arith.constant 0 : i32
    %c0_i32_1 = arith.constant 0 : i32
    return %c0_i32, %c0_i32_0 : i32, i32
  }
  func.func @transform_1(%arg0: i32) -> (i32, i32) {
    %c0_i32 = arith.constant 0 : i32
    %c0_i32_0 = arith.constant 0 : i32
    %c0_i32_1 = arith.constant 0 : i32
    return %c0_i32, %c0_i32_0 : i32, i32
  }
  func.func @transform_2(%arg0: i32) -> (i32, i32) {
    %c0_i32 = arith.constant 0 : i32
    %c0_i32_0 = arith.constant 0 : i32
    return %arg0, %c0_i32 : i32, i32
  }
  func.func @transform_3(%arg0: i32) -> (i32, i32, i32) {
    %c0_i32 = arith.constant 0 : i32
    %c0_i32_0 = arith.constant 0 : i32
    %c0_i32_1 = arith.constant 0 : i32
    return %arg0, %c0_i32, %c0_i32_0 : i32, i32, i32
  }
}

</mosaic_0001>

<llo_original>
// kernel: tpu_custom_call.1
$region0: #{tpu_custom_call.1}
  #allocation0 [shape = 'u32[]', space=smem, size = 0x4, offset = 0x4, fixed_abs, tag = 'smem constant byte address 0x4 - core index']
  #allocation1 [shape = 'u32[144,128]{1,0:T(1,128)}', space=vmem, size = 0x12000, scoped, tag = 'internal scratch']
  %s0 = inlined_call_operand.hbm [shape: f32[1,256], index: 0, kind: input, shape index: {}]
  %s1 = inlined_call_operand.hbm [shape: f32[1,256], index: 1, kind: input, shape index: {}]
  %s2 = inlined_call_operand.hbm [shape: f32[8,256], index: 2, kind: input, shape index: {}]
  %s3 = inlined_call_operand.hbm [shape: f32[1,1,128], index: 3, kind: output, shape index: {}]
  %s4 = sld [smem:[#allocation0]]
  $region34: #{tpu_custom_call.1} parent=0
    _
  %s6 = ssub.s32 1, %s4
  %s7 = scalar_select 0, %s6, %s4
  $region1: #{tpu_custom_call.1} parent=0
    #allocation2 [shape = 'u8[1024]{0}', space=vmem, size = 0x400, scoped, tag = 'input window, operand 0, single buffered']
    #allocation3 [shape = 's32[1]{0}', space=sflag, size = 0x4, scoped, tag = 'scoped memory for tpu_custom_call.1']
    #allocation4 [shape = 's32[1]{0}', space=sflag, size = 0x4, scoped, tag = 'scoped memory for tpu_custom_call.1']
    #allocation5 [shape = 'u8[1024]{0}', space=vmem, size = 0x400, scoped, tag = 'input window, operand 1, single buffered']
    #allocation6 [shape = 's32[1]{0}', space=sflag, size = 0x4, scoped, tag = 'scoped memory for tpu_custom_call.1']
    #allocation7 [shape = 'u8[8192]{0}', space=vmem, size = 0x2000, scoped, tag = 'input window, operand 2, single buffered']
    #allocation8 [shape = 'u8[512]{0}', space=vmem, size = 0x400, scoped, tag = 'output window, operand 0, single buffered']
    %8 = vsyncpa [#allocation3], 0
    %9 = vsyncpa [#allocation6], 0
    %10 = vsyncpa [#allocation4], 0
    // Predicated region
    $region2: #{tpu_custom_call.1} parent=1 // pred_check
      _
    $region3: #{tpu_custom_call.1} parent=1 // pred_check_branch
      %12 = sbr.rel (0) target = $region5
    $region4: #{tpu_custom_call.1} parent=1 // pred_region
      %s14 = ssub.s32 32, 32
      %15 = vsyncadd [#allocation3], %s14
      %s17 = sshll.u32 [#allocation2], 4
      %s18 = int_to_ptr.vmem [resolvable:$true] %s17
      %20 = dma.hbm_to_vmem [thread:$0]  %s0, 32, %s18, [#allocation3]
    $region5: #{tpu_custom_call.1} parent=1 // pred_fallthru
      _
    // Predicated region
    $region6: #{tpu_custom_call.1} parent=1 // pred_check
      _
    $region7: #{tpu_custom_call.1} parent=1 // pred_check_branch
      %22 = sbr.rel (0) target = $region9
    $region8: #{tpu_custom_call.1} parent=1 // pred_region
      %s24 = ssub.s32 32, 32
      %25 = vsyncadd [#allocation6], %s24
      %s27 = sshll.u32 [#allocation5], 4
      %s28 = int_to_ptr.vmem [resolvable:$true] %s27
      %30 = dma.hbm_to_vmem [thread:$0]  %s1, 32, %s28, [#allocation6]
    $region9: #{tpu_custom_call.1} parent=1 // pred_fallthru
      _
    // Predicated region
    $region10: #{tpu_custom_call.1} parent=1 // pred_check
      _
    $region11: #{tpu_custom_call.1} parent=1 // pred_check_branch
      %32 = sbr.rel (0) target = $region13
    $region12: #{tpu_custom_call.1} parent=1 // pred_region
      %s34 = ssub.s32 256, 256
      %35 = vsyncadd [#allocation6], %s34
      %s37 = sshll.u32 [#allocation7], 4
      %s38 = int_to_ptr.vmem [resolvable:$true] %s37
      %40 = dma.hbm_to_vmem [thread:$0]  %s2, 256, %s38, [#allocation6]
    $region13: #{tpu_custom_call.1} parent=1 // pred_fallthru
      _
    // Predicated region
    $region14: #{tpu_custom_call.1} parent=1 // pred_check
      _
    $region15: #{tpu_custom_call.1} parent=1 // pred_check_branch
      %42 = sbr.rel (0) target = $region17
    $region16: #{tpu_custom_call.1} parent=1 // pred_region
      %43 = dma.done [#allocation3], 32
    $region17: #{tpu_custom_call.1} parent=1 // pred_fallthru
      _
    // Predicated region
    $region18: #{tpu_custom_call.1} parent=1 // pred_check
      _
    $region19: #{tpu_custom_call.1} parent=1 // pred_check_branch
      %45 = sbr.rel (0) target = $region21
    $region20: #{tpu_custom_call.1} parent=1 // pred_region
      %46 = dma.done [#allocation6], 32
    $region21: #{tpu_custom_call.1} parent=1 // pred_fallthru
      _
    // Predicated region
    $region22: #{tpu_custom_call.1} parent=1 // pred_check
      _
    $region23: #{tpu_custom_call.1} parent=1 // pred_check_branch
      %48 = sbr.rel (0) target = $region25
    $region24: #{tpu_custom_call.1} parent=1 // pred_region
      %49 = dma.done [#allocation6], 256
    $region25: #{tpu_custom_call.1} parent=1 // pred_fallthru
      _
    %v50 = vld [vmem:[#allocation7] sm:$0xff]
    %v51 = vld [vmem:[#allocation7 + $0x8] sm:$0xff]
    %v52 = vld [vmem:[#allocation2] sm:$0x3]
    %v53 = vld [vmem:[#allocation5] sm:$0x3]
    %54 = vrot.lane.b32.xlu0 %v50, 112
    %v55 = vpop.permute.xlu0 %54
    %56 = vrot.lane.b32.xlu0 %v51, 112
    %v57 = vpop.permute.xlu0 %56
    %v58 = vlaneseq
    %v59 = vand.u32 %v58, 127
    %vm60 = vcmp.lt.s32.totalorder %v59, 112
    %v61 = vsel %vm60, %v55, %v57
    %v62 = vsel %vm60, %v57, %v55
    %v63 = vsub.f32 %v61, %v50
    %v64 = vsub.f32 %v62, %v51
    %v66 = vlaneseq
    %v67 = vshrl.u32 %v66, 7
    %v68 = vsub.s32 0, %v67
    %v69 = vrot.slane %v52, %v68
    %v70 = vlaneseq
    %v71 = vshrl.u32 %v70, 7
    %v72 = vsub.s32 1, %v71
    %v73 = vrot.slane %v52, %v72
    %v76 = vmul.f32 %v63, %v69
    %v77 = vmul.f32 %v64, %v73
    %78 = vrot.lane.b32.xlu0 %v50, 127
    %v79 = vpop.permute.xlu0 %78
    %80 = vrot.lane.b32.xlu0 %v51, 127
    %v81 = vpop.permute.xlu0 %80
    %vm82 = vcmp.lt.s32.totalorder %v59, 127
    %v83 = vsel %vm82, %v79, %v81
    %v84 = vsel %vm82, %v81, %v79
    %v85 = vsub.f32 %v83, %v50
    %v86 = vsub.f32 %v84, %v51
    %v88 = vlaneseq
    %v89 = vshrl.u32 %v88, 7
    %v90 = vsub.s32 0, %v89
    %v91 = vrot.slane %v53, %v90
    %v92 = vlaneseq
    %v93 = vshrl.u32 %v92, 7
    %v94 = vsub.s32 1, %v93
    %v95 = vrot.slane %v53, %v94
    %v98 = vmul.f32 %v85, %v91
    %v99 = vmul.f32 %v86, %v95
    %v100 = vmul.f32 %v76, %v76
    %v101 = vmul.f32 %v77, %v77
    %v102 = vadd.f32 %v100, %v101
    %103 = vadd.xlane.f32.xlu0 %v102
    %v104 = vpop.xlane.xlu0 %103
    %v105 = vrot.slane %v104, 4
    %v106 = vadd.f32 %v104, %v105
    %v107 = vrot.slane %v106, 2
    %v108 = vadd.f32 %v106, %v107
    %v109 = vrot.slane %v108, 1
    %v110 = vadd.f32 %v108, %v109
    %s111 = vtos %v110
    %v112 = vmul.f32 %v98, %v98
    %v113 = vmul.f32 %v99, %v99
    %v114 = vadd.f32 %v112, %v113
    %115 = vadd.xlane.f32.xlu0 %v114
    %v116 = vpop.xlane.xlu0 %115
    %v117 = vrot.slane %v116, 4
    %v118 = vadd.f32 %v116, %v117
    %v119 = vrot.slane %v118, 2
    %v120 = vadd.f32 %v118, %v119
    %v121 = vrot.slane %v120, 1
    %v122 = vadd.f32 %v120, %v121
    %s123 = vtos %v122
    %vm124 = vcmp.eq.s32.totalorder %v59, 0
    %vm125 = vcmp.eq.s32.totalorder %v59, 1
    %v126 = vstv %s123
    %v127 = vsel %vm125, %v126, 0.0
    %v128 = vstv %s111
    %v129 = vsel %vm124, %v128, %v127
    %130 = vst [vmem:[#allocation8] sm:$0x1] %v129
    // Predicated region
    $region26: #{tpu_custom_call.1} parent=1 // pred_check
      _
    $region27: #{tpu_custom_call.1} parent=1 // pred_check_branch
      %132 = sbr.rel (0) target = $region29
    $region28: #{tpu_custom_call.1} parent=1 // pred_region
      %s134 = ssub.s32 16, 16
      %135 = vsyncadd [#allocation4], %s134
      %s137 = sshll.u32 [#allocation8], 4
      %s138 = int_to_ptr.vmem [resolvable:$true] %s137
      %140 = dma.vmem_to_hbm [thread:$0]  %s138, 16, %s3, [#allocation4]
    $region29: #{tpu_custom_call.1} parent=1 // pred_fallthru
      _
    // Predicated region
    $region30: #{tpu_custom_call.1} parent=1 // pred_check
      _
    $region31: #{tpu_custom_call.1} parent=1 // pred_check_branch
      %142 = sbr.rel (0) target = $region33
    $region32: #{tpu_custom_call.1} parent=1 // pred_region
      %143 = dma.done [#allocation4], 16
    $region33: #{tpu_custom_call.1} parent=1 // pred_fallthru
      _
    %144 = vsyncpa [#allocation3], 1
    %145 = vsyncpa [#allocation6], 1
    %146 = vsyncpa [#allocation4], 1

</llo_original>
